<compile_context>
chip_gen: v5e
topology: v5e:2x2
jax: 0.10.0
libtpu: 0.0.40
codegen_flags: <defaults>
</compile_context>

<pallas_src>
import jax
import jax.numpy as jnp
from jax.experimental import pallas as pl
from jax.experimental.pallas import tpu as pltpu

H1, H2 = 400, 300           # logical hidden sizes of Policy_net
H1_PAD, H2_PAD = 512, 384   # lane-padded hidden sizes (multiples of 128)
LANE = 128
TB_MAX = 1024               # max batch-tile rows (multiple of 8)


def _round_up(n, m):
    return ((n + m - 1) // m) * m


def policy_net_kernel(x_ref, w1_ref, b1_ref, w2_ref, b2_ref, w3_ref, b3_ref,
                      out_ref):
    # affine1 + ReLU  (bf16 MXU matmul, f32 accumulate)
    x = x_ref[...].astype(jnp.bfloat16)
    h1 = jnp.dot(x, w1_ref[...], preferred_element_type=jnp.float32)
    h1 = jnp.maximum(h1 + b1_ref[...], 0.0)

    # affine2 + ReLU
    h2 = jnp.dot(h1.astype(jnp.bfloat16), w2_ref[...],
                 preferred_element_type=jnp.float32)
    h2 = jnp.maximum(h2 + b2_ref[...], 0.0)

    # mean_head -> 2 * tanh   (tanh in f32 -> EUP slot)
    m = jnp.dot(h2.astype(jnp.bfloat16), w3_ref[...],
                preferred_element_type=jnp.float32)
    out_ref[...] = 2.0 * jnp.tanh(m + b3_ref[...])


def policy_net_forward(x, params, act_sp):
    """x: (batch, ob_sp) float32. params: padded bf16 weights / f32 biases."""
    w1, b1, w2, b2, w3, b3 = params
    batch, ob_sp = x.shape
    act_pad = w3.shape[1]

    # Batch tiling: TB rows per grid step (multiple of 8); pad batch to fit.
    tb = min(TB_MAX, _round_up(batch, 8))
    batch_pad = _round_up(batch, tb)
    if batch_pad != batch:
        x = jnp.pad(x, ((0, batch_pad - batch), (0, 0)))
    grid = (batch_pad // tb,)

    def resident(arr):
        # Full-array block, constant index map -> fetched once, stays in VMEM.
        return pl.BlockSpec(arr.shape, lambda i: (0, 0))

    out_pad = pl.pallas_call(
        policy_net_kernel,
        out_shape=jax.ShapeDtypeStruct((batch_pad, act_pad), jnp.float32),
        grid=grid,
        in_specs=[
            pl.BlockSpec((tb, ob_sp), lambda i: (i, 0)),   # x: batch-tiled
            resident(w1), resident(b1),
            resident(w2), resident(b2),
            resident(w3), resident(b3),
        ],
        out_specs=pl.BlockSpec((tb, act_pad), lambda i: (i, 0)),
        compiler_params=pltpu.CompilerParams(
            dimension_semantics=("parallel",),   # v7x: split batch tiles over 2 TCs
        ),
    )(x, w1, b1, w2, b2, w3, b3)

    return out_pad[:batch, :act_sp]


def init_params(key, ob_sp, act_sp):
    """nn.Linear-style init (U[-1/sqrt(fan_in), +]) at the logical shapes,
    then zero-pad feature dims to lane multiples and cast weights to bf16."""
    act_pad = _round_up(act_sp, LANE)
    dims = [
        (ob_sp, H1, ob_sp, H1_PAD),
        (H1,   H2, H1_PAD, H2_PAD),
        (H2, act_sp, H2_PAD, act_pad),
    ]
    params = []
    for i, (fin, fout, fin_p, fout_p) in enumerate(dims):
        kw, kb = jax.random.split(jax.random.fold_in(key, i))
        bound = 1.0 / jnp.sqrt(jnp.float32(fin))
        w = jax.random.uniform(kw, (fin, fout), jnp.float32,
                               minval=-bound, maxval=bound)
        b = jax.random.uniform(kb, (1, fout), jnp.float32,
                               minval=-bound, maxval=bound)
        w = jnp.pad(w, ((0, fin_p - fin), (0, fout_p - fout)))
        b = jnp.pad(b, ((0, 0), (0, fout_p - fout)))
        params.extend([w.astype(jnp.bfloat16), b])   # bf16 weights, f32 biases
    return tuple(params)


if __name__ == "__main__":
    key = jax.random.PRNGKey(0)

    batch = 2
    ob_sp = 8      # observation dim
    act_sp = 4     # action dim

    k_x, k_p = jax.random.split(key)
    x = jax.random.normal(k_x, (batch, ob_sp), jnp.float32)
    params = init_params(k_p, ob_sp, act_sp)

    out = policy_net_forward(x, params, act_sp)
    jax.block_until_ready(out)
    assert out.shape == (batch, act_sp)

    # Pure-JAX reference mimicking the same bf16-weight / f32-accum math.
    w1, b1, w2, b2, w3, b3 = params
    h1 = jnp.maximum(
        jnp.dot(x.astype(jnp.bfloat16), w1, preferred_element_type=jnp.float32) + b1, 0.0)
    h2 = jnp.maximum(
        jnp.dot(h1.astype(jnp.bfloat16), w2, preferred_element_type=jnp.float32) + b2, 0.0)
    ref = 2.0 * jnp.tanh(
        jnp.dot(h2.astype(jnp.bfloat16), w3, preferred_element_type=jnp.float32) + b3)
    ref = ref[:, :act_sp]

    assert jnp.allclose(out, ref, atol=1e-3, rtol=1e-3), (
        f"max abs err {jnp.max(jnp.abs(out - ref))}")

    print("KERNEL_OK")
</pallas_src>

<mosaic_0001>
module attributes {stable_mosaic.version = 11 : i64} {
  func.func @policy_net_kernel(%arg0: i32, %arg1: memref<8x8xf32, #tpu.memory_space<vmem>>, %arg2: memref<8x512xbf16, #tpu.memory_space<vmem>>, %arg3: memref<1x512xf32, #tpu.memory_space<vmem>>, %arg4: memref<512x384xbf16, #tpu.memory_space<vmem>>, %arg5: memref<1x384xf32, #tpu.memory_space<vmem>>, %arg6: memref<384x128xbf16, #tpu.memory_space<vmem>>, %arg7: memref<1x128xf32, #tpu.memory_space<vmem>>, %arg8: memref<8x128xf32, #tpu.memory_space<vmem>>) attributes {dimension_semantics = [#tpu.dimension_semantics<parallel>], iteration_bounds = array<i64: 1>, scalar_prefetch = 0 : i64, scratch_operands = 0 : i64, tpu.core_type = #tpu.core_type<tc>, window_params = [{transform_indices = @transform_0, window_bounds = array<i64: 8, 8>}, {pipeline_mode = #tpu.pipeline_mode<synchronous>, transform_indices = @transform_1, window_bounds = array<i64: 8, 512>}, {pipeline_mode = #tpu.pipeline_mode<synchronous>, transform_indices = @transform_2, window_bounds = array<i64: 1, 512>}, {pipeline_mode = #tpu.pipeline_mode<synchronous>, transform_indices = @transform_3, window_bounds = array<i64: 512, 384>}, {pipeline_mode = #tpu.pipeline_mode<synchronous>, transform_indices = @transform_4, window_bounds = array<i64: 1, 384>}, {pipeline_mode = #tpu.pipeline_mode<synchronous>, transform_indices = @transform_5, window_bounds = array<i64: 384, 128>}, {pipeline_mode = #tpu.pipeline_mode<synchronous>, transform_indices = @transform_6, window_bounds = array<i64: 1, 128>}, {transform_indices = @transform_7, window_bounds = array<i64: 8, 128>}]} {
    %c0 = arith.constant 0 : index
    %c0_0 = arith.constant 0 : index
    %0 = vector.load %arg1[%c0, %c0_0] : memref<8x8xf32, #tpu.memory_space<vmem>>, vector<8x8xf32>
    %1 = arith.truncf %0 : vector<8x8xf32> to vector<8x8xbf16>
    %c0_1 = arith.constant 0 : index
    %c0_2 = arith.constant 0 : index
    %2 = vector.load %arg2[%c0_1, %c0_2] : memref<8x512xbf16, #tpu.memory_space<vmem>>, vector<8x512xbf16>
    %cst = arith.constant dense<0.000000e+00> : vector<8x512xf32>
    %3 = tpu.matmul %1, %2, %cst {dimension_numbers = #tpu.dot_dimension_numbers<[1], [0], [0], [1], [0, 0, 1, 1], [], []>} : vector<8x8xbf16>, vector<8x512xbf16>, vector<8x512xf32> -> vector<8x512xf32>
    %c0_3 = arith.constant 0 : index
    %c0_4 = arith.constant 0 : index
    %4 = vector.load %arg3[%c0_3, %c0_4] : memref<1x512xf32, #tpu.memory_space<vmem>>, vector<1x512xf32>
    %5 = vector.broadcast %4 : vector<1x512xf32> to vector<8x512xf32>
    %6 = arith.addf %3, %5 : vector<8x512xf32>
    %cst_5 = arith.constant 0.000000e+00 : f32
    %7 = vector.broadcast %cst_5 : f32 to vector<8x512xf32>
    %8 = arith.maximumf %6, %7 : vector<8x512xf32>
    %9 = arith.truncf %8 : vector<8x512xf32> to vector<8x512xbf16>
    %c0_6 = arith.constant 0 : index
    %c0_7 = arith.constant 0 : index
    %10 = vector.load %arg4[%c0_6, %c0_7] : memref<512x384xbf16, #tpu.memory_space<vmem>>, vector<512x384xbf16>
    %cst_8 = arith.constant dense<0.000000e+00> : vector<8x384xf32>
    %11 = tpu.matmul %9, %10, %cst_8 {dimension_numbers = #tpu.dot_dimension_numbers<[1], [0], [0], [1], [0, 0, 1, 1], [], []>} : vector<8x512xbf16>, vector<512x384xbf16>, vector<8x384xf32> -> vector<8x384xf32>
    %c0_9 = arith.constant 0 : index
    %c0_10 = arith.constant 0 : index
    %12 = vector.load %arg5[%c0_9, %c0_10] : memref<1x384xf32, #tpu.memory_space<vmem>>, vector<1x384xf32>
    %13 = vector.broadcast %12 : vector<1x384xf32> to vector<8x384xf32>
    %14 = arith.addf %11, %13 : vector<8x384xf32>
    %cst_11 = arith.constant 0.000000e+00 : f32
    %15 = vector.broadcast %cst_11 : f32 to vector<8x384xf32>
    %16 = arith.maximumf %14, %15 : vector<8x384xf32>
    %17 = arith.truncf %16 : vector<8x384xf32> to vector<8x384xbf16>
    %c0_12 = arith.constant 0 : index
    %c0_13 = arith.constant 0 : index
    %18 = vector.load %arg6[%c0_12, %c0_13] : memref<384x128xbf16, #tpu.memory_space<vmem>>, vector<384x128xbf16>
    %cst_14 = arith.constant dense<0.000000e+00> : vector<8x128xf32>
    %19 = tpu.matmul %17, %18, %cst_14 {dimension_numbers = #tpu.dot_dimension_numbers<[1], [0], [0], [1], [0, 0, 1, 1], [], []>} : vector<8x384xbf16>, vector<384x128xbf16>, vector<8x128xf32> -> vector<8x128xf32>
    %c0_15 = arith.constant 0 : index
    %c0_16 = arith.constant 0 : index
    %20 = vector.load %arg7[%c0_15, %c0_16] : memref<1x128xf32, #tpu.memory_space<vmem>>, vector<1x128xf32>
    %21 = vector.broadcast %20 : vector<1x128xf32> to vector<8x128xf32>
    %22 = arith.addf %19, %21 : vector<8x128xf32>
    %23 = math.tanh %22 : vector<8x128xf32>
    %cst_17 = arith.constant 2.000000e+00 : f32
    %24 = vector.broadcast %cst_17 : f32 to vector<8x128xf32>
    %25 = arith.mulf %24, %23 : vector<8x128xf32>
    %c0_18 = arith.constant 0 : index
    %c0_19 = arith.constant 0 : index
    %26 = vector.load %arg8[%c0_18, %c0_19] : memref<8x128xf32, #tpu.memory_space<vmem>>, vector<8x128xf32>
    tpu.vector_store %arg8[%c0_18, %c0_19], %25 {strides = array<i32>} : memref<8x128xf32, #tpu.memory_space<vmem>>, vector<8x128xf32>,
    return
  }
  func.func @transform_0(%arg0: i32) -> (i32, i32) {
    %c0_i32 = arith.constant 0 : i32
    %c0_i32_0 = arith.constant 0 : i32
    return %arg0, %c0_i32 : i32, i32
  }
  func.func @transform_1(%arg0: i32) -> (i32, i32) {
    %c0_i32 = arith.constant 0 : i32
    %c0_i32_0 = arith.constant 0 : i32
    %c0_i32_1 = arith.constant 0 : i32
    return %c0_i32, %c0_i32_0 : i32, i32
  }
  func.func @transform_2(%arg0: i32) -> (i32, i32) {
    %c0_i32 = arith.constant 0 : i32
    %c0_i32_0 = arith.constant 0 : i32
    %c0_i32_1 = arith.constant 0 : i32
    return %c0_i32, %c0_i32_0 : i32, i32
  }
  func.func @transform_3(%arg0: i32) -> (i32, i32) {
    %c0_i32 = arith.constant 0 : i32
    %c0_i32_0 = arith.constant 0 : i32
    %c0_i32_1 = arith.constant 0 : i32
    return %c0_i32, %c0_i32_0 : i32, i32
  }
  func.func @transform_4(%arg0: i32) -> (i32, i32) {
    %c0_i32 = arith.constant 0 : i32
    %c0_i32_0 = arith.constant 0 : i32
    %c0_i32_1 = arith.constant 0 : i32
    return %c0_i32, %c0_i32_0 : i32, i32
  }
  func.func @transform_5(%arg0: i32) -> (i32, i32) {
    %c0_i32 = arith.constant 0 : i32
    %c0_i32_0 = arith.constant 0 : i32
    %c0_i32_1 = arith.constant 0 : i32
    return %c0_i32, %c0_i32_0 : i32, i32
  }
  func.func @transform_6(%arg0: i32) -> (i32, i32) {
    %c0_i32 = arith.constant 0 : i32
    %c0_i32_0 = arith.constant 0 : i32
    %c0_i32_1 = arith.constant 0 : i32
    return %c0_i32, %c0_i32_0 : i32, i32
  }
  func.func @transform_7(%arg0: i32) -> (i32, i32) {
    %c0_i32 = arith.constant 0 : i32
    %c0_i32_0 = arith.constant 0 : i32
    return %arg0, %c0_i32 : i32, i32
  }
}

</mosaic_0001>

<llo_original>
// kernel: tpu_custom_call.1
$region0: #{tpu_custom_call.1}
  #allocation0 [shape = 'u32[]', space=smem, size = 0x4, offset = 0x4, fixed_abs, tag = 'smem constant byte address 0x4 - core index']
  #allocation1 [shape = 'u32[72,128]{1,0:T(1,128)}', space=vmem, size = 0x9000, scoped, tag = 'internal scratch']
  %s0 = inlined_call_operand.hbm [shape: f32[8,8], index: 0, kind: input, shape index: {}]
  %s1 = inlined_call_operand.hbm [shape: bf16[8,512], index: 1, kind: input, shape index: {}]
  %s2 = inlined_call_operand.hbm [shape: f32[1,512], index: 2, kind: input, shape index: {}]
  %s3 = inlined_call_operand.hbm [shape: bf16[512,384], index: 3, kind: input, shape index: {}]
  %s4 = inlined_call_operand.vmem [shape: f32[1,384], index: 4, kind: input, shape index: {}]
  %s5 = inlined_call_operand.hbm [shape: bf16[384,128], index: 5, kind: input, shape index: {}]
  %s6 = inlined_call_operand.vmem [shape: f32[1,128], index: 6, kind: input, shape index: {}]
  %s7 = inlined_call_operand.hbm [shape: f32[8,128], index: 7, kind: output, shape index: {}]
  %s8 = sld [smem:[#allocation0]]
  $region58: #{tpu_custom_call.1} parent=0
    _
  %s10 = ssub.s32 1, %s8
  %s11 = scalar_select 0, %s10, %s8
  $region1: #{tpu_custom_call.1} parent=0
    #allocation2 [shape = 'u8[4096]{0}', space=vmem, size = 0x1000, scoped, tag = 'input window, operand 0, single buffered']
    #allocation3 [shape = 's32[1]{0}', space=sflag, size = 0x4, scoped, tag = 'scoped memory for tpu_custom_call.1']
    #allocation4 [shape = 's32[1]{0}', space=sflag, size = 0x4, scoped, tag = 'scoped memory for tpu_custom_call.1']
    #allocation5 [shape = 'u8[8192]{0}', space=vmem, size = 0x2000, scoped, tag = 'input window, operand 1, single buffered']
    #allocation6 [shape = 's32[1]{0}', space=sflag, size = 0x4, scoped, tag = 'scoped memory for tpu_custom_call.1']
    #allocation7 [shape = 'u8[2048]{0}', space=vmem, size = 0x800, scoped, tag = 'input window, operand 2, single buffered']
    #allocation8 [shape = 'u8[393216]{0}', space=vmem, size = 0x60000, scoped, tag = 'input window, operand 3, single buffered']
    #allocation9 [shape = 's32[1]{0}', space=sflag, size = 0x4, scoped, tag = 'scoped memory for tpu_custom_call.1']
    #allocation10 [shape = 'u8[98304]{0}', space=vmem, size = 0x18000, scoped, tag = 'input window, operand 5, single buffered']
    #allocation11 [shape = 'u8[4096]{0}', space=vmem, size = 0x1000, scoped, tag = 'output window, operand 0, single buffered']
    %12 = vsyncpa [#allocation3], 0
    %13 = vsyncpa [#allocation6], 0
    %14 = vsyncpa [#allocation9], 0
    %15 = vsyncpa [#allocation4], 0
    // Predicated region
    $region2: #{tpu_custom_call.1} parent=1 // pred_check
      _
    $region3: #{tpu_custom_call.1} parent=1 // pred_check_branch
      %17 = sbr.rel (0) target = $region5
    $region4: #{tpu_custom_call.1} parent=1 // pred_region
      %19 = vsyncadd [#allocation3], 0
      %s21 = sshll.u32 %s0, 4
      %s22 = int_to_ptr.hbm [resolvable:$true] %s21
      %s23 = sshll.u32 [#allocation2], 4
      %s24 = int_to_ptr.vmem [resolvable:$true] %s23
      %26 = dma.hbm_to_vmem [thread:$0]  %s22, 128, %s24, [#allocation3]
    $region5: #{tpu_custom_call.1} parent=1 // pred_fallthru
      _
    // Predicated region
    $region6: #{tpu_custom_call.1} parent=1 // pred_check
      _
    $region7: #{tpu_custom_call.1} parent=1 // pred_check_branch
      %28 = sbr.rel (0) target = $region9
    $region8: #{tpu_custom_call.1} parent=1 // pred_region
      %30 = vsyncadd [#allocation6], 0
      %s32 = sshll.u32 %s1, 4
      %s33 = int_to_ptr.hbm [resolvable:$true] %s32
      %s34 = sshll.u32 [#allocation5], 4
      %s35 = int_to_ptr.vmem [resolvable:$true] %s34
      %37 = dma.hbm_to_vmem [thread:$0]  %s33, 256, %s35, [#allocation6]
    $region9: #{tpu_custom_call.1} parent=1 // pred_fallthru
      _
    // Predicated region
    $region10: #{tpu_custom_call.1} parent=1 // pred_check
      _
    $region11: #{tpu_custom_call.1} parent=1 // pred_check_branch
      %39 = sbr.rel (0) target = $region13
    $region12: #{tpu_custom_call.1} parent=1 // pred_region
      %41 = vsyncadd [#allocation6], 0
      %s43 = sshll.u32 %s2, 4
      %s44 = int_to_ptr.hbm [resolvable:$true] %s43
      %s45 = sshll.u32 [#allocation7], 4
      %s46 = int_to_ptr.vmem [resolvable:$true] %s45
      %48 = dma.hbm_to_vmem [thread:$0]  %s44, 64, %s46, [#allocation6]
    $region13: #{tpu_custom_call.1} parent=1 // pred_fallthru
      _
    // Predicated region
    $region14: #{tpu_custom_call.1} parent=1 // pred_check
      _
    $region15: #{tpu_custom_call.1} parent=1 // pred_check_branch
      %50 = sbr.rel (0) target = $region17
    $region16: #{tpu_custom_call.1} parent=1 // pred_region
      %52 = vsyncadd [#allocation9], 0
      %s53 = sshll.u32 %s3, 4
      %s54 = int_to_ptr.hbm [resolvable:$true] %s53
      %s55 = sshll.u32 [#allocation8], 4
      %s56 = int_to_ptr.vmem [resolvable:$true] %s55
      %61 = dma.hbm_to_vmem [thread:$0]  %s54, 12288, %s56, [#allocation9], 192, 192, 12
    $region17: #{tpu_custom_call.1} parent=1 // pred_fallthru
      _
    // Predicated region
    $region18: #{tpu_custom_call.1} parent=1 // pred_check
      _
    $region19: #{tpu_custom_call.1} parent=1 // pred_check_branch
      %63 = sbr.rel (0) target = $region21
    $region20: #{tpu_custom_call.1} parent=1 // pred_region
      _
    $region21: #{tpu_custom_call.1} parent=1 // pred_fallthru
      _
    // Predicated region
    $region22: #{tpu_custom_call.1} parent=1 // pred_check
      _
    $region23: #{tpu_custom_call.1} parent=1 // pred_check_branch
      %65 = sbr.rel (0) target = $region25
    $region24: #{tpu_custom_call.1} parent=1 // pred_region
      %67 = vsyncadd [#allocation9], 0
      %s68 = sshll.u32 %s5, 4
      %s69 = int_to_ptr.hbm [resolvable:$true] %s68
      %s70 = sshll.u32 [#allocation10], 4
      %s71 = int_to_ptr.vmem [resolvable:$true] %s70
      %76 = dma.hbm_to_vmem [thread:$0]  %s69, 3072, %s71, [#allocation9], 64, 64, 4
    $region25: #{tpu_custom_call.1} parent=1 // pred_fallthru
      _
    // Predicated region
    $region26: #{tpu_custom_call.1} parent=1 // pred_check
      _
    $region27: #{tpu_custom_call.1} parent=1 // pred_check_branch
      %78 = sbr.rel (0) target = $region29
    $region28: #{tpu_custom_call.1} parent=1 // pred_region
      _
    $region29: #{tpu_custom_call.1} parent=1 // pred_fallthru
      _
    // Predicated region
    $region30: #{tpu_custom_call.1} parent=1 // pred_check
      _
    $region31: #{tpu_custom_call.1} parent=1 // pred_check_branch
      %80 = sbr.rel (0) target = $region33
    $region32: #{tpu_custom_call.1} parent=1 // pred_region
      %82 = dma.done [#allocation3], 128
    $region33: #{tpu_custom_call.1} parent=1 // pred_fallthru
      _
    // Predicated region
    $region34: #{tpu_custom_call.1} parent=1 // pred_check
      _
    $region35: #{tpu_custom_call.1} parent=1 // pred_check_branch
      %84 = sbr.rel (0) target = $region37
    $region36: #{tpu_custom_call.1} parent=1 // pred_region
      %86 = dma.done [#allocation6], 256
    $region37: #{tpu_custom_call.1} parent=1 // pred_fallthru
      _
    // Predicated region
    $region38: #{tpu_custom_call.1} parent=1 // pred_check
      _
    $region39: #{tpu_custom_call.1} parent=1 // pred_check_branch
      %88 = sbr.rel (0) target = $region41
    $region40: #{tpu_custom_call.1} parent=1 // pred_region
      %90 = dma.done [#allocation6], 64
    $region41: #{tpu_custom_call.1} parent=1 // pred_fallthru
      _
    // Predicated region
    $region42: #{tpu_custom_call.1} parent=1 // pred_check
      _
    $region43: #{tpu_custom_call.1} parent=1 // pred_check_branch
      %92 = sbr.rel (0) target = $region45
    $region44: #{tpu_custom_call.1} parent=1 // pred_region
      %94 = dma.done [#allocation9], 12288
    $region45: #{tpu_custom_call.1} parent=1 // pred_fallthru
      _
    // Predicated region
    $region46: #{tpu_custom_call.1} parent=1 // pred_check
      _
    $region47: #{tpu_custom_call.1} parent=1 // pred_check_branch
      %96 = sbr.rel (0) target = $region49
    $region48: #{tpu_custom_call.1} parent=1 // pred_region
      %98 = dma.done [#allocation9], 3072
    $region49: #{tpu_custom_call.1} parent=1 // pred_fallthru
      _
    %v100 = vld [vmem:[#allocation2] sm:$0xff]
    %v101 = vpack.c.bf16 %v100, %v100
    %v102 = vld [vmem:[#allocation5] sm:$0xff]
    %v103 = vld [vmem:[#allocation5 + $0x8] sm:$0xff]
    %v104 = vld [vmem:[#allocation7] sm:$0xf]
    %v106 = vperm.slane %v104, 0
    %v107 = vperm.slane %v104, 1
    %v108 = vperm.slane %v104, 2
    %v109 = vperm.slane %v104, 3
    %v116 = vunpack.c.l.b16 %v102
    %v117 = vunpack.c.h.b16 %v102
    %v118 = vunpack.c.l.b16 %v103
    %v119 = vunpack.c.h.b16 %v103
    %v120 = vpack.c.b16 %v116, %v116
    %v121 = vpack.c.b16 %v117, %v117
    %v122 = vpack.c.b16 %v118, %v118
    %v123 = vpack.c.b16 %v119, %v119
    %vm124 = vcmask 64512
    %v126 = vsel %vm124, %v101, 0
    %vm128 = vcmask 1043456
    %v130 = vsel %vm128, %v120, 0
    %v133 = vsel %vm128, %v121, 0
    %v136 = vsel %vm128, %v122, 0
    %v139 = vsel %vm128, %v123, 0
    %141 = vmatpush.bf16.msra.mxu0 0
    %142 = vmatpush.bf16.msra.mxu0 0
    %143 = vmatpush.bf16.msra.mxu0 0
    %144 = vmatpush.bf16.msra.mxu0 0
    %145 = vmatpush.bf16.msra.mxu0 0
    %146 = vmatpush.bf16.msra.mxu0 0
    %147 = vmatpush.bf16.msra.mxu0 0
    %148 = vmatpush.bf16.msra.mxu0 %v130
    %149 = vmatmul.bf16.gmra.mxu0 %v126
    %v150 = vpop.f32.mrf.mxu0
    %v151 = vadd.f32 %v106, %v150
    %v152 = vpop.f32.mrf.mxu0
    %153 = vdwg.mxu0
    %154 = vmatpush.bf16.msra.mxu0 0
    %155 = vmatpush.bf16.msra.mxu0 0
    %156 = vmatpush.bf16.msra.mxu0 0
    %157 = vmatpush.bf16.msra.mxu0 0
    %158 = vmatpush.bf16.msra.mxu0 0
    %159 = vmatpush.bf16.msra.mxu0 0
    %160 = vmatpush.bf16.msra.mxu0 0
    %161 = vmatpush.bf16.msra.mxu0 %v133
    %162 = vmatmul.bf16.gmra.mxu0 %v126
    %v163 = vpop.f32.mrf.mxu0
    %v164 = vadd.f32 %v107, %v163
    %v165 = vpop.f32.mrf.mxu0
    %166 = vdwg.mxu0
    %167 = vmatpush.bf16.msra.mxu0 0
    %168 = vmatpush.bf16.msra.mxu0 0
    %169 = vmatpush.bf16.msra.mxu0 0
    %170 = vmatpush.bf16.msra.mxu0 0
    %171 = vmatpush.bf16.msra.mxu0 0
    %172 = vmatpush.bf16.msra.mxu0 0
    %173 = vmatpush.bf16.msra.mxu0 0
    %174 = vmatpush.bf16.msra.mxu0 %v136
    %175 = vmatmul.bf16.gmra.mxu0 %v126
    %v176 = vpop.f32.mrf.mxu0
    %v177 = vadd.f32 %v108, %v176
    %v178 = vpop.f32.mrf.mxu0
    %179 = vdwg.mxu0
    %180 = vmatpush.bf16.msra.mxu0 0
    %181 = vmatpush.bf16.msra.mxu0 0
    %182 = vmatpush.bf16.msra.mxu0 0
    %183 = vmatpush.bf16.msra.mxu0 0
    %184 = vmatpush.bf16.msra.mxu0 0
    %185 = vmatpush.bf16.msra.mxu0 0
    %186 = vmatpush.bf16.msra.mxu0 0
    %187 = vmatpush.bf16.msra.mxu0 %v139
    %188 = vmatmul.bf16.gmra.mxu0 %v126
    %v189 = vpop.f32.mrf.mxu0
    %v190 = vadd.f32 %v109, %v189
    %v191 = vpop.f32.mrf.mxu0
    %192 = vdwg.mxu0
    %v193 = vmax.f32 %v151, 0.0
    %v194 = vmax.f32 %v164, 0.0
    %v195 = vmax.f32 %v177, 0.0
    %v196 = vmax.f32 %v190, 0.0
    %v197 = vpack.c.bf16 %v193, %v193
    %v198 = vpack.c.bf16 %v194, %v194
    %v199 = vpack.c.bf16 %v195, %v195
    %v200 = vpack.c.bf16 %v196, %v196
    %v201 = vld [vmem:[#allocation8] sm:$0xff]
    %v202 = vld [vmem:[#allocation8 + $0x8] sm:$0xf]
    %v203 = vld [vmem:[#allocation8 + $0xc] sm:$0xff]
    %v204 = vld [vmem:[#allocation8 + $0x14] sm:$0xf]
    %v205 = vld [vmem:[#allocation8 + $0x18] sm:$0xff]
    %v206 = vld [vmem:[#allocation8 + $0x20] sm:$0xf]
    %v207 = vld [vmem:[#allocation8 + $0x24] sm:$0xff]
    %v208 = vld [vmem:[#allocation8 + $0x2c] sm:$0xf]
    %v209 = vld [vmem:[#allocation8 + $0x30] sm:$0xff]
    %v210 = vld [vmem:[#allocation8 + $0x38] sm:$0xf]
    %v211 = vld [vmem:[#allocation8 + $0x3c] sm:$0xff]
    %v212 = vld [vmem:[#allocation8 + $0x44] sm:$0xf]
    %v213 = vld [vmem:[#allocation8 + $0x48] sm:$0xff]
    %v214 = vld [vmem:[#allocation8 + $0x50] sm:$0xf]
    %v215 = vld [vmem:[#allocation8 + $0x54] sm:$0xff]
    %v216 = vld [vmem:[#allocation8 + $0x5c] sm:$0xf]
    %v217 = vld [vmem:[#allocation8 + $0x60] sm:$0xff]
    %v218 = vld [vmem:[#allocation8 + $0x68] sm:$0xf]
    %v219 = vld [vmem:[#allocation8 + $0x6c] sm:$0xff]
    %v220 = vld [vmem:[#allocation8 + $0x74] sm:$0xf]
    %v221 = vld [vmem:[#allocation8 + $0x78] sm:$0xff]
    %v222 = vld [vmem:[#allocation8 + $0x80] sm:$0xf]
    %v223 = vld [vmem:[#allocation8 + $0x84] sm:$0xff]
    %v224 = vld [vmem:[#allocation8 + $0x8c] sm:$0xf]
    %v225 = vld [vmem:[#allocation8 + $0x90] sm:$0xff]
    %v226 = vld [vmem:[#allocation8 + $0x98] sm:$0xf]
    %v227 = vld [vmem:[#allocation8 + $0x9c] sm:$0xff]
    %v228 = vld [vmem:[#allocation8 + $0xa4] sm:$0xf]
    %v229 = vld [vmem:[#allocation8 + $0xa8] sm:$0xff]
    %v230 = vld [vmem:[#allocation8 + $0xb0] sm:$0xf]
    %v231 = vld [vmem:[#allocation8 + $0xb4] sm:$0xff]
    %v232 = vld [vmem:[#allocation8 + $0xbc] sm:$0xf]
    %v233 = vld [vmem:[#allocation8 + $0xc0] sm:$0xff]
    %v234 = vld [vmem:[#allocation8 + $0xc8] sm:$0xf]
    %v235 = vld [vmem:[#allocation8 + $0xcc] sm:$0xff]
    %v236 = vld [vmem:[#allocation8 + $0xd4] sm:$0xf]
    %v237 = vld [vmem:[#allocation8 + $0xd8] sm:$0xff]
    %v238 = vld [vmem:[#allocation8 + $0xe0] sm:$0xf]
    %v239 = vld [vmem:[#allocation8 + $0xe4] sm:$0xff]
    %v240 = vld [vmem:[#allocation8 + $0xec] sm:$0xf]
    %v241 = vld [vmem:[#allocation8 + $0xf0] sm:$0xff]
    %v242 = vld [vmem:[#allocation8 + $0xf8] sm:$0xf]
    %v243 = vld [vmem:[#allocation8 + $0xfc] sm:$0xff]
    %v244 = vld [vmem:[#allocation8 + $0x104] sm:$0xf]
    %v245 = vld [vmem:[#allocation8 + $0x108] sm:$0xff]
    %v246 = vld [vmem:[#allocation8 + $0x110] sm:$0xf]
    %v247 = vld [vmem:[#allocation8 + $0x114] sm:$0xff]
    %v248 = vld [vmem:[#allocation8 + $0x11c] sm:$0xf]
    %v249 = vld [vmem:[#allocation8 + $0x120] sm:$0xff]
    %v250 = vld [vmem:[#allocation8 + $0x128] sm:$0xf]
    %v251 = vld [vmem:[#allocation8 + $0x12c] sm:$0xff]
    %v252 = vld [vmem:[#allocation8 + $0x134] sm:$0xf]
    %v253 = vld [vmem:[#allocation8 + $0x138] sm:$0xff]
    %v254 = vld [vmem:[#allocation8 + $0x140] sm:$0xf]
    %v255 = vld [vmem:[#allocation8 + $0x144] sm:$0xff]
    %v256 = vld [vmem:[#allocation8 + $0x14c] sm:$0xf]
    %v257 = vld [vmem:[#allocation8 + $0x150] sm:$0xff]
    %v258 = vld [vmem:[#allocation8 + $0x158] sm:$0xf]
    %v259 = vld [vmem:[#allocation8 + $0x15c] sm:$0xff]
    %v260 = vld [vmem:[#allocation8 + $0x164] sm:$0xf]
    %v261 = vld [vmem:[#allocation8 + $0x168] sm:$0xff]
    %v262 = vld [vmem:[#allocation8 + $0x170] sm:$0xf]
    %v263 = vld [vmem:[#allocation8 + $0x174] sm:$0xff]
    %v264 = vld [vmem:[#allocation8 + $0x17c] sm:$0xf]
    %v265 = vld [vmem:[#allocation8 + $0x180] sm:$0xff]
    %v266 = vld [vmem:[#allocation8 + $0x188] sm:$0xf]
    %v267 = vld [vmem:[#allocation8 + $0x18c] sm:$0xff]
    %v268 = vld [vmem:[#allocation8 + $0x194] sm:$0xf]
    %v269 = vld [vmem:[#allocation8 + $0x198] sm:$0xff]
    %v270 = vld [vmem:[#allocation8 + $0x1a0] sm:$0xf]
    %v271 = vld [vmem:[#allocation8 + $0x1a4] sm:$0xff]
    %v272 = vld [vmem:[#allocation8 + $0x1ac] sm:$0xf]
    %v273 = vld [vmem:[#allocation8 + $0x1b0] sm:$0xff]
    %v274 = vld [vmem:[#allocation8 + $0x1b8] sm:$0xf]
    %v275 = vld [vmem:[#allocation8 + $0x1bc] sm:$0xff]
    %v276 = vld [vmem:[#allocation8 + $0x1c4] sm:$0xf]
    %v277 = vld [vmem:[#allocation8 + $0x1c8] sm:$0xff]
    %v278 = vld [vmem:[#allocation8 + $0x1d0] sm:$0xf]
    %v279 = vld [vmem:[#allocation8 + $0x1d4] sm:$0xff]
    %v280 = vld [vmem:[#allocation8 + $0x1dc] sm:$0xf]
    %v281 = vld [vmem:[#allocation8 + $0x1e0] sm:$0xff]
    %v282 = vld [vmem:[#allocation8 + $0x1e8] sm:$0xf]
    %v283 = vld [vmem:[#allocation8 + $0x1ec] sm:$0xff]
    %v284 = vld [vmem:[#allocation8 + $0x1f4] sm:$0xf]
    %v285 = vld [vmem:[#allocation8 + $0x1f8] sm:$0xff]
    %v286 = vld [vmem:[#allocation8 + $0x200] sm:$0xf]
    %v287 = vld [vmem:[#allocation8 + $0x204] sm:$0xff]
    %v288 = vld [vmem:[#allocation8 + $0x20c] sm:$0xf]
    %v289 = vld [vmem:[#allocation8 + $0x210] sm:$0xff]
    %v290 = vld [vmem:[#allocation8 + $0x218] sm:$0xf]
    %v291 = vld [vmem:[#allocation8 + $0x21c] sm:$0xff]
    %v292 = vld [vmem:[#allocation8 + $0x224] sm:$0xf]
    %v293 = vld [vmem:[#allocation8 + $0x228] sm:$0xff]
    %v294 = vld [vmem:[#allocation8 + $0x230] sm:$0xf]
    %v295 = vld [vmem:[#allocation8 + $0x234] sm:$0xff]
    %v296 = vld [vmem:[#allocation8 + $0x23c] sm:$0xf]
    %v297 = vld [vmem:[#allocation8 + $0x240] sm:$0xff]
    %v298 = vld [vmem:[#allocation8 + $0x248] sm:$0xf]
    %v299 = vld [vmem:[#allocation8 + $0x24c] sm:$0xff]
    %v300 = vld [vmem:[#allocation8 + $0x254] sm:$0xf]
    %v301 = vld [vmem:[#allocation8 + $0x258] sm:$0xff]
    %v302 = vld [vmem:[#allocation8 + $0x260] sm:$0xf]
    %v303 = vld [vmem:[#allocation8 + $0x264] sm:$0xff]
    %v304 = vld [vmem:[#allocation8 + $0x26c] sm:$0xf]
    %v305 = vld [vmem:[#allocation8 + $0x270] sm:$0xff]
    %v306 = vld [vmem:[#allocation8 + $0x278] sm:$0xf]
    %v307 = vld [vmem:[#allocation8 + $0x27c] sm:$0xff]
    %v308 = vld [vmem:[#allocation8 + $0x284] sm:$0xf]
    %v309 = vld [vmem:[#allocation8 + $0x288] sm:$0xff]
    %v310 = vld [vmem:[#allocation8 + $0x290] sm:$0xf]
    %v311 = vld [vmem:[#allocation8 + $0x294] sm:$0xff]
    %v312 = vld [vmem:[#allocation8 + $0x29c] sm:$0xf]
    %v313 = vld [vmem:[#allocation8 + $0x2a0] sm:$0xff]
    %v314 = vld [vmem:[#allocation8 + $0x2a8] sm:$0xf]
    %v315 = vld [vmem:[#allocation8 + $0x2ac] sm:$0xff]
    %v316 = vld [vmem:[#allocation8 + $0x2b4] sm:$0xf]
    %v317 = vld [vmem:[#allocation8 + $0x2b8] sm:$0xff]
    %v318 = vld [vmem:[#allocation8 + $0x2c0] sm:$0xf]
    %v319 = vld [vmem:[#allocation8 + $0x2c4] sm:$0xff]
    %v320 = vld [vmem:[#allocation8 + $0x2cc] sm:$0xf]
    %v321 = vld [vmem:[#allocation8 + $0x2d0] sm:$0xff]
    %v322 = vld [vmem:[#allocation8 + $0x2d8] sm:$0xf]
    %v323 = vld [vmem:[#allocation8 + $0x2dc] sm:$0xff]
    %v324 = vld [vmem:[#allocation8 + $0x2e4] sm:$0xf]
    %v325 = vld [vmem:[#allocation8 + $0x2e8] sm:$0xff]
    %v326 = vld [vmem:[#allocation8 + $0x2f0] sm:$0xf]
    %v327 = vld [vmem:[#allocation8 + $0x2f4] sm:$0xff]
    %v328 = vld [vmem:[#allocation8 + $0x2fc] sm:$0xf]
    %v329 = vld [vmem:[%s4] sm:$0x7]
    %v331 = vperm.slane %v329, 0
    %v332 = vperm.slane %v329, 1
    %v333 = vperm.slane %v329, 2
    %v465 = vunpack.c.l.b16 %v201
    %v466 = vunpack.c.h.b16 %v201
    %v467 = vunpack.c.l.b16 %v202
    %v468 = vunpack.c.l.b16 %v203
    %v469 = vunpack.c.h.b16 %v203
    %v470 = vunpack.c.l.b16 %v204
    %v471 = vunpack.c.l.b16 %v205
    %v472 = vunpack.c.h.b16 %v205
    %v473 = vunpack.c.l.b16 %v206
    %v474 = vunpack.c.l.b16 %v207
    %v475 = vunpack.c.h.b16 %v207
    %v476 = vunpack.c.l.b16 %v208
    %v477 = vunpack.c.l.b16 %v209
    %v478 = vunpack.c.h.b16 %v209
    %v479 = vunpack.c.l.b16 %v210
    %v480 = vunpack.c.l.b16 %v211
    %v481 = vunpack.c.h.b16 %v211
    %v482 = vunpack.c.l.b16 %v212
    %v483 = vunpack.c.l.b16 %v213
    %v484 = vunpack.c.h.b16 %v213
    %v485 = vunpack.c.l.b16 %v214
    %v486 = vunpack.c.l.b16 %v215
    %v487 = vunpack.c.h.b16 %v215
    %v488 = vunpack.c.l.b16 %v216
    %v489 = vunpack.c.l.b16 %v217
    %v490 = vunpack.c.h.b16 %v217
    %v491 = vunpack.c.l.b16 %v218
    %v492 = vunpack.c.l.b16 %v219
    %v493 = vunpack.c.h.b16 %v219
    %v494 = vunpack.c.l.b16 %v220
    %v495 = vunpack.c.l.b16 %v221
    %v496 = vunpack.c.h.b16 %v221
    %v497 = vunpack.c.l.b16 %v222
    %v498 = vunpack.c.l.b16 %v223
    %v499 = vunpack.c.h.b16 %v223
    %v500 = vunpack.c.l.b16 %v224
    %v501 = vunpack.c.l.b16 %v225
    %v502 = vunpack.c.h.b16 %v225
    %v503 = vunpack.c.l.b16 %v226
    %v504 = vunpack.c.l.b16 %v227
    %v505 = vunpack.c.h.b16 %v227
    %v506 = vunpack.c.l.b16 %v228
    %v507 = vunpack.c.l.b16 %v229
    %v508 = vunpack.c.h.b16 %v229
    %v509 = vunpack.c.l.b16 %v230
    %v510 = vunpack.c.l.b16 %v231
    %v511 = vunpack.c.h.b16 %v231
    %v512 = vunpack.c.l.b16 %v232
    %v513 = vunpack.c.l.b16 %v233
    %v514 = vunpack.c.h.b16 %v233
    %v515 = vunpack.c.l.b16 %v234
    %v516 = vunpack.c.l.b16 %v235
    %v517 = vunpack.c.h.b16 %v235
    %v518 = vunpack.c.l.b16 %v236
    %v519 = vunpack.c.l.b16 %v237
    %v520 = vunpack.c.h.b16 %v237
    %v521 = vunpack.c.l.b16 %v238
    %v522 = vunpack.c.l.b16 %v239
    %v523 = vunpack.c.h.b16 %v239
    %v524 = vunpack.c.l.b16 %v240
    %v525 = vunpack.c.l.b16 %v241
    %v526 = vunpack.c.h.b16 %v241
    %v527 = vunpack.c.l.b16 %v242
    %v528 = vunpack.c.l.b16 %v243
    %v529 = vunpack.c.h.b16 %v243
    %v530 = vunpack.c.l.b16 %v244
    %v531 = vunpack.c.l.b16 %v245
    %v532 = vunpack.c.h.b16 %v245
    %v533 = vunpack.c.l.b16 %v246
    %v534 = vunpack.c.l.b16 %v247
    %v535 = vunpack.c.h.b16 %v247
    %v536 = vunpack.c.l.b16 %v248
    %v537 = vunpack.c.l.b16 %v249
    %v538 = vunpack.c.h.b16 %v249
    %v539 = vunpack.c.l.b16 %v250
    %v540 = vunpack.c.l.b16 %v251
    %v541 = vunpack.c.h.b16 %v251
    %v542 = vunpack.c.l.b16 %v252
    %v543 = vunpack.c.l.b16 %v253
    %v544 = vunpack.c.h.b16 %v253
    %v545 = vunpack.c.l.b16 %v254
    %v546 = vunpack.c.l.b16 %v255
    %v547 = vunpack.c.h.b16 %v255
    %v548 = vunpack.c.l.b16 %v256
    %v549 = vunpack.c.l.b16 %v257
    %v550 = vunpack.c.h.b16 %v257
    %v551 = vunpack.c.l.b16 %v258
    %v552 = vunpack.c.l.b16 %v259
    %v553 = vunpack.c.h.b16 %v259
    %v554 = vunpack.c.l.b16 %v260
    %v555 = vunpack.c.l.b16 %v261
    %v556 = vunpack.c.h.b16 %v261
    %v557 = vunpack.c.l.b16 %v262
    %v558 = vunpack.c.l.b16 %v263
    %v559 = vunpack.c.h.b16 %v263
    %v560 = vunpack.c.l.b16 %v264
    %v561 = vunpack.c.l.b16 %v265
    %v562 = vunpack.c.h.b16 %v265
    %v563 = vunpack.c.l.b16 %v266
    %v564 = vunpack.c.l.b16 %v267
    %v565 = vunpack.c.h.b16 %v267
    %v566 = vunpack.c.l.b16 %v268
    %v567 = vunpack.c.l.b16 %v269
    %v568 = vunpack.c.h.b16 %v269
    %v569 = vunpack.c.l.b16 %v270
    %v570 = vunpack.c.l.b16 %v271
    %v571 = vunpack.c.h.b16 %v271
    %v572 = vunpack.c.l.b16 %v272
    %v573 = vunpack.c.l.b16 %v273
    %v574 = vunpack.c.h.b16 %v273
    %v575 = vunpack.c.l.b16 %v274
    %v576 = vunpack.c.l.b16 %v275
    %v577 = vunpack.c.h.b16 %v275
    %v578 = vunpack.c.l.b16 %v276
    %v579 = vunpack.c.l.b16 %v277
    %v580 = vunpack.c.h.b16 %v277
    %v581 = vunpack.c.l.b16 %v278
    %v582 = vunpack.c.l.b16 %v279
    %v583 = vunpack.c.h.b16 %v279
    %v584 = vunpack.c.l.b16 %v280
    %v585 = vunpack.c.l.b16 %v281
    %v586 = vunpack.c.h.b16 %v281
    %v587 = vunpack.c.l.b16 %v282
    %v588 = vunpack.c.l.b16 %v283
    %v589 = vunpack.c.h.b16 %v283
    %v590 = vunpack.c.l.b16 %v284
    %v591 = vunpack.c.l.b16 %v285
    %v592 = vunpack.c.h.b16 %v285
    %v593 = vunpack.c.l.b16 %v286
    %v594 = vunpack.c.l.b16 %v287
    %v595 = vunpack.c.h.b16 %v287
    %v596 = vunpack.c.l.b16 %v288
    %v597 = vunpack.c.l.b16 %v289
    %v598 = vunpack.c.h.b16 %v289
    %v599 = vunpack.c.l.b16 %v290
    %v600 = vunpack.c.l.b16 %v291
    %v601 = vunpack.c.h.b16 %v291
    %v602 = vunpack.c.l.b16 %v292
    %v603 = vunpack.c.l.b16 %v293
    %v604 = vunpack.c.h.b16 %v293
    %v605 = vunpack.c.l.b16 %v294
    %v606 = vunpack.c.l.b16 %v295
    %v607 = vunpack.c.h.b16 %v295
    %v608 = vunpack.c.l.b16 %v296
    %v609 = vunpack.c.l.b16 %v297
    %v610 = vunpack.c.h.b16 %v297
    %v611 = vunpack.c.l.b16 %v298
    %v612 = vunpack.c.l.b16 %v299
    %v613 = vunpack.c.h.b16 %v299
    %v614 = vunpack.c.l.b16 %v300
    %v615 = vunpack.c.l.b16 %v301
    %v616 = vunpack.c.h.b16 %v301
    %v617 = vunpack.c.l.b16 %v302
    %v618 = vunpack.c.l.b16 %v303
    %v619 = vunpack.c.h.b16 %v303
    %v620 = vunpack.c.l.b16 %v304
    %v621 = vunpack.c.l.b16 %v305
    %v622 = vunpack.c.h.b16 %v305
    %v623 = vunpack.c.l.b16 %v306
    %v624 = vunpack.c.l.b16 %v307
    %v625 = vunpack.c.h.b16 %v307
    %v626 = vunpack.c.l.b16 %v308
    %v627 = vunpack.c.l.b16 %v309
    %v628 = vunpack.c.h.b16 %v309
    %v629 = vunpack.c.l.b16 %v310
    %v630 = vunpack.c.l.b16 %v311
    %v631 = vunpack.c.h.b16 %v311
    %v632 = vunpack.c.l.b16 %v312
    %v633 = vunpack.c.l.b16 %v313
    %v634 = vunpack.c.h.b16 %v313
    %v635 = vunpack.c.l.b16 %v314
    %v636 = vunpack.c.l.b16 %v315
    %v637 = vunpack.c.h.b16 %v315
    %v638 = vunpack.c.l.b16 %v316
    %v639 = vunpack.c.l.b16 %v317
    %v640 = vunpack.c.h.b16 %v317
    %v641 = vunpack.c.l.b16 %v318
    %v642 = vunpack.c.l.b16 %v319
    %v643 = vunpack.c.h.b16 %v319
    %v644 = vunpack.c.l.b16 %v320
    %v645 = vunpack.c.l.b16 %v321
    %v646 = vunpack.c.h.b16 %v321
    %v647 = vunpack.c.l.b16 %v322
    %v648 = vunpack.c.l.b16 %v323
    %v649 = vunpack.c.h.b16 %v323
    %v650 = vunpack.c.l.b16 %v324
    %v651 = vunpack.c.l.b16 %v325
    %v652 = vunpack.c.h.b16 %v325
    %v653 = vunpack.c.l.b16 %v326
    %v654 = vunpack.c.l.b16 %v327
    %v655 = vunpack.c.h.b16 %v327
    %v656 = vunpack.c.l.b16 %v328
    %v657 = vpack.c.b16 %v468, %v465
    %v658 = vpack.c.b16 %v469, %v466
    %v659 = vpack.c.b16 %v470, %v467
    %v660 = vpack.c.b16 %v474, %v471
    %v661 = vpack.c.b16 %v475, %v472
    %v662 = vpack.c.b16 %v476, %v473
    %v663 = vpack.c.b16 %v480, %v477
    %v664 = vpack.c.b16 %v481, %v478
    %v665 = vpack.c.b16 %v482, %v479
    %v666 = vpack.c.b16 %v486, %v483
    %v667 = vpack.c.b16 %v487, %v484
    %v668 = vpack.c.b16 %v488, %v485
    %v669 = vpack.c.b16 %v492, %v489
    %v670 = vpack.c.b16 %v493, %v490
    %v671 = vpack.c.b16 %v494, %v491
    %v672 = vpack.c.b16 %v498, %v495
    %v673 = vpack.c.b16 %v499, %v496
    %v674 = vpack.c.b16 %v500, %v497
    %v675 = vpack.c.b16 %v504, %v501
    %v676 = vpack.c.b16 %v505, %v502
    %v677 = vpack.c.b16 %v506, %v503
    %v678 = vpack.c.b16 %v510, %v507
    %v679 = vpack.c.b16 %v511, %v508
    %v680 = vpack.c.b16 %v512, %v509
    %v681 = vpack.c.b16 %v516, %v513
    %v682 = vpack.c.b16 %v517, %v514
    %v683 = vpack.c.b16 %v518, %v515
    %v684 = vpack.c.b16 %v522, %v519
    %v685 = vpack.c.b16 %v523, %v520
    %v686 = vpack.c.b16 %v524, %v521
    %v687 = vpack.c.b16 %v528, %v525
    %v688 = vpack.c.b16 %v529, %v526
    %v689 = vpack.c.b16 %v530, %v527
    %v690 = vpack.c.b16 %v534, %v531
    %v691 = vpack.c.b16 %v535, %v532
    %v692 = vpack.c.b16 %v536, %v533
    %v693 = vpack.c.b16 %v540, %v537
    %v694 = vpack.c.b16 %v541, %v538
    %v695 = vpack.c.b16 %v542, %v539
    %v696 = vpack.c.b16 %v546, %v543
    %v697 = vpack.c.b16 %v547, %v544
    %v698 = vpack.c.b16 %v548, %v545
    %v699 = vpack.c.b16 %v552, %v549
    %v700 = vpack.c.b16 %v553, %v550
    %v701 = vpack.c.b16 %v554, %v551
    %v702 = vpack.c.b16 %v558, %v555
    %v703 = vpack.c.b16 %v559, %v556
    %v704 = vpack.c.b16 %v560, %v557
    %v705 = vpack.c.b16 %v564, %v561
    %v706 = vpack.c.b16 %v565, %v562
    %v707 = vpack.c.b16 %v566, %v563
    %v708 = vpack.c.b16 %v570, %v567
    %v709 = vpack.c.b16 %v571, %v568
    %v710 = vpack.c.b16 %v572, %v569
    %v711 = vpack.c.b16 %v576, %v573
    %v712 = vpack.c.b16 %v577, %v574
    %v713 = vpack.c.b16 %v578, %v575
    %v714 = vpack.c.b16 %v582, %v579
    %v715 = vpack.c.b16 %v583, %v580
    %v716 = vpack.c.b16 %v584, %v581
    %v717 = vpack.c.b16 %v588, %v585
    %v718 = vpack.c.b16 %v589, %v586
    %v719 = vpack.c.b16 %v590, %v587
    %v720 = vpack.c.b16 %v594, %v591
    %v721 = vpack.c.b16 %v595, %v592
    %v722 = vpack.c.b16 %v596, %v593
    %v723 = vpack.c.b16 %v600, %v597
    %v724 = vpack.c.b16 %v601, %v598
    %v725 = vpack.c.b16 %v602, %v599
    %v726 = vpack.c.b16 %v606, %v603
    %v727 = vpack.c.b16 %v607, %v604
    %v728 = vpack.c.b16 %v608, %v605
    %v729 = vpack.c.b16 %v612, %v609
    %v730 = vpack.c.b16 %v613, %v610
    %v731 = vpack.c.b16 %v614, %v611
    %v732 = vpack.c.b16 %v618, %v615
    %v733 = vpack.c.b16 %v619, %v616
    %v734 = vpack.c.b16 %v620, %v617
    %v735 = vpack.c.b16 %v624, %v621
    %v736 = vpack.c.b16 %v625, %v622
    %v737 = vpack.c.b16 %v626, %v623
    %v738 = vpack.c.b16 %v630, %v627
    %v739 = vpack.c.b16 %v631, %v628
    %v740 = vpack.c.b16 %v632, %v629
    %v741 = vpack.c.b16 %v636, %v633
    %v742 = vpack.c.b16 %v637, %v634
    %v743 = vpack.c.b16 %v638, %v635
    %v744 = vpack.c.b16 %v642, %v639
    %v745 = vpack.c.b16 %v643, %v640
    %v746 = vpack.c.b16 %v644, %v641
    %v747 = vpack.c.b16 %v648, %v645
    %v748 = vpack.c.b16 %v649, %v646
    %v749 = vpack.c.b16 %v650, %v647
    %v750 = vpack.c.b16 %v654, %v651
    %v751 = vpack.c.b16 %v655, %v652
    %v752 = vpack.c.b16 %v656, %v653
    %849 = vmatpush.bf16.msra.mxu0 %v678
    %850 = vmatpush.bf16.msra.mxu0 %v675
    %851 = vmatpush.bf16.msra.mxu0 %v672
    %852 = vmatpush.bf16.msra.mxu0 %v669
    %853 = vmatpush.bf16.msra.mxu0 %v666
    %854 = vmatpush.bf16.msra.mxu0 %v663
    %855 = vmatpush.bf16.msra.mxu0 %v660
    %856 = vmatpush.bf16.msra.mxu0 %v657
    %857 = vmatmul.bf16.gmra.mxu0 %v197
    %v858 = vpop.f32.mrf.mxu0
    %v859 = vadd.f32 %v331, %v858
    %v860 = vpop.f32.mrf.mxu0
    %861 = vdwg.mxu0
    %862 = vmatpush.bf16.msra.mxu0 %v702
    %863 = vmatpush.bf16.msra.mxu0 %v699
    %864 = vmatpush.bf16.msra.mxu0 %v696
    %865 = vmatpush.bf16.msra.mxu0 %v693
    %866 = vmatpush.bf16.msra.mxu0 %v690
    %867 = vmatpush.bf16.msra.mxu0 %v687
    %868 = vmatpush.bf16.msra.mxu0 %v684
    %869 = vmatpush.bf16.msra.mxu0 %v681
    %870 = vmatmul.bf16.gmra.mxu0 %v198
    %v871 = vpop.f32.mrf.mxu0
    %v872 = vadd.f32 %v859, %v871
    %v873 = vpop.f32.mrf.mxu0
    %874 = vdwg.mxu0
    %875 = vmatpush.bf16.msra.mxu0 %v726
    %876 = vmatpush.bf16.msra.mxu0 %v723
    %877 = vmatpush.bf16.msra.mxu0 %v720
    %878 = vmatpush.bf16.msra.mxu0 %v717
    %879 = vmatpush.bf16.msra.mxu0 %v714
    %880 = vmatpush.bf16.msra.mxu0 %v711
    %881 = vmatpush.bf16.msra.mxu0 %v708
    %882 = vmatpush.bf16.msra.mxu0 %v705
    %883 = vmatmul.bf16.gmra.mxu0 %v199
    %v884 = vpop.f32.mrf.mxu0
    %v885 = vadd.f32 %v872, %v884
    %v886 = vpop.f32.mrf.mxu0
    %887 = vdwg.mxu0
    %888 = vmatpush.bf16.msra.mxu0 %v750
    %889 = vmatpush.bf16.msra.mxu0 %v747
    %890 = vmatpush.bf16.msra.mxu0 %v744
    %891 = vmatpush.bf16.msra.mxu0 %v741
    %892 = vmatpush.bf16.msra.mxu0 %v738
    %893 = vmatpush.bf16.msra.mxu0 %v735
    %894 = vmatpush.bf16.msra.mxu0 %v732
    %895 = vmatpush.bf16.msra.mxu0 %v729
    %896 = vmatmul.bf16.gmra.mxu0 %v200
    %v897 = vpop.f32.mrf.mxu0
    %v898 = vadd.f32 %v885, %v897
    %v899 = vpop.f32.mrf.mxu0
    %900 = vdwg.mxu0
    %901 = vmatpush.bf16.msra.mxu0 %v679
    %902 = vmatpush.bf16.msra.mxu0 %v676
    %903 = vmatpush.bf16.msra.mxu0 %v673
    %904 = vmatpush.bf16.msra.mxu0 %v670
    %905 = vmatpush.bf16.msra.mxu0 %v667
    %906 = vmatpush.bf16.msra.mxu0 %v664
    %907 = vmatpush.bf16.msra.mxu0 %v661
    %908 = vmatpush.bf16.msra.mxu0 %v658
    %909 = vmatmul.bf16.gmra.mxu0 %v197
    %v910 = vpop.f32.mrf.mxu0
    %v911 = vadd.f32 %v332, %v910
    %v912 = vpop.f32.mrf.mxu0
    %913 = vdwg.mxu0
    %914 = vmatpush.bf16.msra.mxu0 %v703
    %915 = vmatpush.bf16.msra.mxu0 %v700
    %916 = vmatpush.bf16.msra.mxu0 %v697
    %917 = vmatpush.bf16.msra.mxu0 %v694
    %918 = vmatpush.bf16.msra.mxu0 %v691
    %919 = vmatpush.bf16.msra.mxu0 %v688
    %920 = vmatpush.bf16.msra.mxu0 %v685
    %921 = vmatpush.bf16.msra.mxu0 %v682
    %922 = vmatmul.bf16.gmra.mxu0 %v198
    %v923 = vpop.f32.mrf.mxu0
    %v924 = vadd.f32 %v911, %v923
    %v925 = vpop.f32.mrf.mxu0
    %926 = vdwg.mxu0
    %927 = vmatpush.bf16.msra.mxu0 %v727
    %928 = vmatpush.bf16.msra.mxu0 %v724
    %929 = vmatpush.bf16.msra.mxu0 %v721
    %930 = vmatpush.bf16.msra.mxu0 %v718
    %931 = vmatpush.bf16.msra.mxu0 %v715
    %932 = vmatpush.bf16.msra.mxu0 %v712
    %933 = vmatpush.bf16.msra.mxu0 %v709
    %934 = vmatpush.bf16.msra.mxu0 %v706
    %935 = vmatmul.bf16.gmra.mxu0 %v199
    %v936 = vpop.f32.mrf.mxu0
    %v937 = vadd.f32 %v924, %v936
    %v938 = vpop.f32.mrf.mxu0
    %939 = vdwg.mxu0
    %940 = vmatpush.bf16.msra.mxu0 %v751
    %941 = vmatpush.bf16.msra.mxu0 %v748
    %942 = vmatpush.bf16.msra.mxu0 %v745
    %943 = vmatpush.bf16.msra.mxu0 %v742
    %944 = vmatpush.bf16.msra.mxu0 %v739
    %945 = vmatpush.bf16.msra.mxu0 %v736
    %946 = vmatpush.bf16.msra.mxu0 %v733
    %947 = vmatpush.bf16.msra.mxu0 %v730
    %948 = vmatmul.bf16.gmra.mxu0 %v200
    %v949 = vpop.f32.mrf.mxu0
    %v950 = vadd.f32 %v937, %v949
    %v951 = vpop.f32.mrf.mxu0
    %952 = vdwg.mxu0
    %953 = vmatpush.bf16.msra.mxu0 %v680
    %954 = vmatpush.bf16.msra.mxu0 %v677
    %955 = vmatpush.bf16.msra.mxu0 %v674
    %956 = vmatpush.bf16.msra.mxu0 %v671
    %957 = vmatpush.bf16.msra.mxu0 %v668
    %958 = vmatpush.bf16.msra.mxu0 %v665
    %959 = vmatpush.bf16.msra.mxu0 %v662
    %960 = vmatpush.bf16.msra.mxu0 %v659
    %961 = vmatmul.bf16.gmra.mxu0 %v197
    %v962 = vpop.f32.mrf.mxu0
    %v963 = vadd.f32 %v333, %v962
    %v964 = vpop.f32.mrf.mxu0
    %965 = vdwg.mxu0
    %966 = vmatpush.bf16.msra.mxu0 %v704
    %967 = vmatpush.bf16.msra.mxu0 %v701
    %968 = vmatpush.bf16.msra.mxu0 %v698
    %969 = vmatpush.bf16.msra.mxu0 %v695
    %970 = vmatpush.bf16.msra.mxu0 %v692
    %971 = vmatpush.bf16.msra.mxu0 %v689
    %972 = vmatpush.bf16.msra.mxu0 %v686
    %973 = vmatpush.bf16.msra.mxu0 %v683
    %974 = vmatmul.bf16.gmra.mxu0 %v198
    %v975 = vpop.f32.mrf.mxu0
    %v976 = vadd.f32 %v963, %v975
    %v977 = vpop.f32.mrf.mxu0
    %978 = vdwg.mxu0
    %979 = vmatpush.bf16.msra.mxu0 %v728
    %980 = vmatpush.bf16.msra.mxu0 %v725
    %981 = vmatpush.bf16.msra.mxu0 %v722
    %982 = vmatpush.bf16.msra.mxu0 %v719
    %983 = vmatpush.bf16.msra.mxu0 %v716
    %984 = vmatpush.bf16.msra.mxu0 %v713
    %985 = vmatpush.bf16.msra.mxu0 %v710
    %986 = vmatpush.bf16.msra.mxu0 %v707
    %987 = vmatmul.bf16.gmra.mxu0 %v199
    %v988 = vpop.f32.mrf.mxu0
    %v989 = vadd.f32 %v976, %v988
    %v990 = vpop.f32.mrf.mxu0
    %991 = vdwg.mxu0
    %992 = vmatpush.bf16.msra.mxu0 %v752
    %993 = vmatpush.bf16.msra.mxu0 %v749
    %994 = vmatpush.bf16.msra.mxu0 %v746
    %995 = vmatpush.bf16.msra.mxu0 %v743
    %996 = vmatpush.bf16.msra.mxu0 %v740
    %997 = vmatpush.bf16.msra.mxu0 %v737
    %998 = vmatpush.bf16.msra.mxu0 %v734
    %999 = vmatpush.bf16.msra.mxu0 %v731
    %1000 = vmatmul.bf16.gmra.mxu0 %v200
    %v1001 = vpop.f32.mrf.mxu0
    %v1002 = vadd.f32 %v989, %v1001
    %v1003 = vpop.f32.mrf.mxu0
    %1004 = vdwg.mxu0
    %v1005 = vmax.f32 %v898, 0.0
    %v1006 = vmax.f32 %v950, 0.0
    %v1007 = vmax.f32 %v1002, 0.0
    %v1008 = vpack.c.bf16 %v1005, %v1005
    %v1009 = vpack.c.bf16 %v1006, %v1006
    %v1010 = vpack.c.bf16 %v1007, %v1007
    %v1011 = vld [vmem:[#allocation10] sm:$0xf]
    %v1012 = vld [vmem:[#allocation10 + $0x4] sm:$0xf]
    %v1013 = vld [vmem:[#allocation10 + $0x8] sm:$0xf]
    %v1014 = vld [vmem:[#allocation10 + $0xc] sm:$0xf]
    %v1015 = vld [vmem:[#allocation10 + $0x10] sm:$0xf]
    %v1016 = vld [vmem:[#allocation10 + $0x14] sm:$0xf]
    %v1017 = vld [vmem:[#allocation10 + $0x18] sm:$0xf]
    %v1018 = vld [vmem:[#allocation10 + $0x1c] sm:$0xf]
    %v1019 = vld [vmem:[#allocation10 + $0x20] sm:$0xf]
    %v1020 = vld [vmem:[#allocation10 + $0x24] sm:$0xf]
    %v1021 = vld [vmem:[#allocation10 + $0x28] sm:$0xf]
    %v1022 = vld [vmem:[#allocation10 + $0x2c] sm:$0xf]
    %v1023 = vld [vmem:[#allocation10 + $0x30] sm:$0xf]
    %v1024 = vld [vmem:[#allocation10 + $0x34] sm:$0xf]
    %v1025 = vld [vmem:[#allocation10 + $0x38] sm:$0xf]
    %v1026 = vld [vmem:[#allocation10 + $0x3c] sm:$0xf]
    %v1027 = vld [vmem:[#allocation10 + $0x40] sm:$0xf]
    %v1028 = vld [vmem:[#allocation10 + $0x44] sm:$0xf]
    %v1029 = vld [vmem:[#allocation10 + $0x48] sm:$0xf]
    %v1030 = vld [vmem:[#allocation10 + $0x4c] sm:$0xf]
    %v1031 = vld [vmem:[#allocation10 + $0x50] sm:$0xf]
    %v1032 = vld [vmem:[#allocation10 + $0x54] sm:$0xf]
    %v1033 = vld [vmem:[#allocation10 + $0x58] sm:$0xf]
    %v1034 = vld [vmem:[#allocation10 + $0x5c] sm:$0xf]
    %v1035 = vld [vmem:[#allocation10 + $0x60] sm:$0xf]
    %v1036 = vld [vmem:[#allocation10 + $0x64] sm:$0xf]
    %v1037 = vld [vmem:[#allocation10 + $0x68] sm:$0xf]
    %v1038 = vld [vmem:[#allocation10 + $0x6c] sm:$0xf]
    %v1039 = vld [vmem:[#allocation10 + $0x70] sm:$0xf]
    %v1040 = vld [vmem:[#allocation10 + $0x74] sm:$0xf]
    %v1041 = vld [vmem:[#allocation10 + $0x78] sm:$0xf]
    %v1042 = vld [vmem:[#allocation10 + $0x7c] sm:$0xf]
    %v1043 = vld [vmem:[#allocation10 + $0x80] sm:$0xf]
    %v1044 = vld [vmem:[#allocation10 + $0x84] sm:$0xf]
    %v1045 = vld [vmem:[#allocation10 + $0x88] sm:$0xf]
    %v1046 = vld [vmem:[#allocation10 + $0x8c] sm:$0xf]
    %v1047 = vld [vmem:[#allocation10 + $0x90] sm:$0xf]
    %v1048 = vld [vmem:[#allocation10 + $0x94] sm:$0xf]
    %v1049 = vld [vmem:[#allocation10 + $0x98] sm:$0xf]
    %v1050 = vld [vmem:[#allocation10 + $0x9c] sm:$0xf]
    %v1051 = vld [vmem:[#allocation10 + $0xa0] sm:$0xf]
    %v1052 = vld [vmem:[#allocation10 + $0xa4] sm:$0xf]
    %v1053 = vld [vmem:[#allocation10 + $0xa8] sm:$0xf]
    %v1054 = vld [vmem:[#allocation10 + $0xac] sm:$0xf]
    %v1055 = vld [vmem:[#allocation10 + $0xb0] sm:$0xf]
    %v1056 = vld [vmem:[#allocation10 + $0xb4] sm:$0xf]
    %v1057 = vld [vmem:[#allocation10 + $0xb8] sm:$0xf]
    %v1058 = vld [vmem:[#allocation10 + $0xbc] sm:$0xf]
    %v1059 = vld [vmem:[%s6] sm:$0x1]
    %v1061 = vperm.slane %v1059, 0
    %v1111 = vunpack.c.l.b16 %v1011
    %v1112 = vunpack.c.l.b16 %v1012
    %v1113 = vunpack.c.l.b16 %v1013
    %v1114 = vunpack.c.l.b16 %v1014
    %v1115 = vunpack.c.l.b16 %v1015
    %v1116 = vunpack.c.l.b16 %v1016
    %v1117 = vunpack.c.l.b16 %v1017
    %v1118 = vunpack.c.l.b16 %v1018
    %v1119 = vunpack.c.l.b16 %v1019
    %v1120 = vunpack.c.l.b16 %v1020
    %v1121 = vunpack.c.l.b16 %v1021
    %v1122 = vunpack.c.l.b16 %v1022
    %v1123 = vunpack.c.l.b16 %v1023
    %v1124 = vunpack.c.l.b16 %v1024
    %v1125 = vunpack.c.l.b16 %v1025
    %v1126 = vunpack.c.l.b16 %v1026
    %v1127 = vunpack.c.l.b16 %v1027
    %v1128 = vunpack.c.l.b16 %v1028
    %v1129 = vunpack.c.l.b16 %v1029
    %v1130 = vunpack.c.l.b16 %v1030
    %v1131 = vunpack.c.l.b16 %v1031
    %v1132 = vunpack.c.l.b16 %v1032
    %v1133 = vunpack.c.l.b16 %v1033
    %v1134 = vunpack.c.l.b16 %v1034
    %v1135 = vunpack.c.l.b16 %v1035
    %v1136 = vunpack.c.l.b16 %v1036
    %v1137 = vunpack.c.l.b16 %v1037
    %v1138 = vunpack.c.l.b16 %v1038
    %v1139 = vunpack.c.l.b16 %v1039
    %v1140 = vunpack.c.l.b16 %v1040
    %v1141 = vunpack.c.l.b16 %v1041
    %v1142 = vunpack.c.l.b16 %v1042
    %v1143 = vunpack.c.l.b16 %v1043
    %v1144 = vunpack.c.l.b16 %v1044
    %v1145 = vunpack.c.l.b16 %v1045
    %v1146 = vunpack.c.l.b16 %v1046
    %v1147 = vunpack.c.l.b16 %v1047
    %v1148 = vunpack.c.l.b16 %v1048
    %v1149 = vunpack.c.l.b16 %v1049
    %v1150 = vunpack.c.l.b16 %v1050
    %v1151 = vunpack.c.l.b16 %v1051
    %v1152 = vunpack.c.l.b16 %v1052
    %v1153 = vunpack.c.l.b16 %v1053
    %v1154 = vunpack.c.l.b16 %v1054
    %v1155 = vunpack.c.l.b16 %v1055
    %v1156 = vunpack.c.l.b16 %v1056
    %v1157 = vunpack.c.l.b16 %v1057
    %v1158 = vunpack.c.l.b16 %v1058
    %v1159 = vpack.c.b16 %v1112, %v1111
    %v1160 = vpack.c.b16 %v1114, %v1113
    %v1161 = vpack.c.b16 %v1116, %v1115
    %v1162 = vpack.c.b16 %v1118, %v1117
    %v1163 = vpack.c.b16 %v1120, %v1119
    %v1164 = vpack.c.b16 %v1122, %v1121
    %v1165 = vpack.c.b16 %v1124, %v1123
    %v1166 = vpack.c.b16 %v1126, %v1125
    %v1167 = vpack.c.b16 %v1128, %v1127
    %v1168 = vpack.c.b16 %v1130, %v1129
    %v1169 = vpack.c.b16 %v1132, %v1131
    %v1170 = vpack.c.b16 %v1134, %v1133
    %v1171 = vpack.c.b16 %v1136, %v1135
    %v1172 = vpack.c.b16 %v1138, %v1137
    %v1173 = vpack.c.b16 %v1140, %v1139
    %v1174 = vpack.c.b16 %v1142, %v1141
    %v1175 = vpack.c.b16 %v1144, %v1143
    %v1176 = vpack.c.b16 %v1146, %v1145
    %v1177 = vpack.c.b16 %v1148, %v1147
    %v1178 = vpack.c.b16 %v1150, %v1149
    %v1179 = vpack.c.b16 %v1152, %v1151
    %v1180 = vpack.c.b16 %v1154, %v1153
    %v1181 = vpack.c.b16 %v1156, %v1155
    %v1182 = vpack.c.b16 %v1158, %v1157
    %1207 = vmatpush.bf16.msra.mxu0 %v1166
    %1208 = vmatpush.bf16.msra.mxu0 %v1165
    %1209 = vmatpush.bf16.msra.mxu0 %v1164
    %1210 = vmatpush.bf16.msra.mxu0 %v1163
    %1211 = vmatpush.bf16.msra.mxu0 %v1162
    %1212 = vmatpush.bf16.msra.mxu0 %v1161
    %1213 = vmatpush.bf16.msra.mxu0 %v1160
    %1214 = vmatpush.bf16.msra.mxu0 %v1159
    %1215 = vmatmul.bf16.gmra.mxu0 %v1008
    %v1216 = vpop.f32.mrf.mxu0
    %v1217 = vadd.f32 %v1061, %v1216
    %v1218 = vpop.f32.mrf.mxu0
    %1219 = vdwg.mxu0
    %1220 = vmatpush.bf16.msra.mxu0 %v1174
    %1221 = vmatpush.bf16.msra.mxu0 %v1173
    %1222 = vmatpush.bf16.msra.mxu0 %v1172
    %1223 = vmatpush.bf16.msra.mxu0 %v1171
    %1224 = vmatpush.bf16.msra.mxu0 %v1170
    %1225 = vmatpush.bf16.msra.mxu0 %v1169
    %1226 = vmatpush.bf16.msra.mxu0 %v1168
    %1227 = vmatpush.bf16.msra.mxu0 %v1167
    %1228 = vmatmul.bf16.gmra.mxu0 %v1009
    %v1229 = vpop.f32.mrf.mxu0
    %v1230 = vadd.f32 %v1217, %v1229
    %v1231 = vpop.f32.mrf.mxu0
    %1232 = vdwg.mxu0
    %1233 = vmatpush.bf16.msra.mxu0 %v1182
    %1234 = vmatpush.bf16.msra.mxu0 %v1181
    %1235 = vmatpush.bf16.msra.mxu0 %v1180
    %1236 = vmatpush.bf16.msra.mxu0 %v1179
    %1237 = vmatpush.bf16.msra.mxu0 %v1178
    %1238 = vmatpush.bf16.msra.mxu0 %v1177
    %1239 = vmatpush.bf16.msra.mxu0 %v1176
    %1240 = vmatpush.bf16.msra.mxu0 %v1175
    %1241 = vmatmul.bf16.gmra.mxu0 %v1010
    %v1242 = vpop.f32.mrf.mxu0
    %v1243 = vadd.f32 %v1230, %v1242
    %v1244 = vpop.f32.mrf.mxu0
    %1245 = vdwg.mxu0
    %v1246 = vtanh.pop %v1243
    %v1247 = vmul.f32 %v1246, 2.0
    %1248 = vst [vmem:[#allocation11] sm:$0xff] %v1247
    // Predicated region
    $region50: #{tpu_custom_call.1} parent=1 // pred_check
      _
    $region51: #{tpu_custom_call.1} parent=1 // pred_check_branch
      %1250 = sbr.rel (0) target = $region53
    $region52: #{tpu_custom_call.1} parent=1 // pred_region
      %1252 = vsyncadd [#allocation4], 0
      %s1254 = sshll.u32 [#allocation11], 4
      %s1255 = int_to_ptr.vmem [resolvable:$true] %s1254
      %s1256 = sshll.u32 %s7, 4
      %s1257 = int_to_ptr.hbm [resolvable:$true] %s1256
      %1259 = dma.vmem_to_hbm [thread:$0]  %s1255, 128, %s1257, [#allocation4]
    $region53: #{tpu_custom_call.1} parent=1 // pred_fallthru
      _
    // Predicated region
    $region54: #{tpu_custom_call.1} parent=1 // pred_check
      _
    $region55: #{tpu_custom_call.1} parent=1 // pred_check_branch
      %1261 = sbr.rel (0) target = $region57
    $region56: #{tpu_custom_call.1} parent=1 // pred_region
      %1263 = dma.done [#allocation4], 128
    $region57: #{tpu_custom_call.1} parent=1 // pred_fallthru
      _
    %1264 = vsyncpa [#allocation3], 1
    %1265 = vsyncpa [#allocation6], 1
    %1266 = vsyncpa [#allocation9], 1
    %1267 = vsyncpa [#allocation4], 1

</llo_original>
